<compile_context>
chip_gen: v6e
topology: v6e:2x2x1
jax: 0.10.0
libtpu: 0.0.40
codegen_flags: <defaults>
</compile_context>

<pallas_src>
import functools

import jax
import jax.numpy as jnp
from jax.experimental import pallas as pl
from jax.experimental.pallas import tpu as pltpu


def _round_up(x: int, m: int) -> int:
    return (x + m - 1) // m * m


def _sublane(dtype) -> int:
    # Native sublane packing: 8 rows for 4-byte, 16 for 2-byte, 32 for 1-byte.
    return {4: 8, 2: 16, 1: 32}.get(jnp.dtype(dtype).itemsize, 8)


def _pick_kn_tiles(k: int, o: int):
    """(tn, tk) depend only on the weight shape -> usable for prepacking."""
    # Balanced split so padding never exceeds one alignment unit per tile.
    n_tiles_o = max(1, -(-o // 512))
    tn = min(_round_up(-(-o // n_tiles_o), 128), 512)
    n_tiles_k = max(1, -(-k // 2048))
    tk = min(_round_up(-(-k // n_tiles_k), 128), 2048)
    return tn, tk


def _pick_m_tile(n: int, compute_dtype) -> int:
    sub = _sublane(compute_dtype)
    n_tiles = max(1, -(-n // 512))
    return min(_round_up(-(-n // n_tiles), sub), 512)


# ---------------------------------------------------------------------------
# Kernels
# ---------------------------------------------------------------------------

def _dense_kernel_single(x_ref, w_ref, b_ref, o_ref):
    # x: (tm, tk)  w: (tk, tn)  b: (1, tn) f32  o: (tm, tn)
    acc = jnp.dot(x_ref[...], w_ref[...], preferred_element_type=jnp.float32)
    o_ref[...] = (acc + b_ref[...]).astype(o_ref.dtype)


def _dense_kernel_multi(x_ref, w_ref, b_ref, o_ref, acc_ref):
    # Same as above but with a K-reduction grid axis (innermost) and an f32
    # VMEM accumulator.
    k = pl.program_id(2)

    @pl.when(k == 0)
    def _():
        acc_ref[...] = jnp.zeros_like(acc_ref)

    acc_ref[...] += jnp.dot(x_ref[...], w_ref[...],
                            preferred_element_type=jnp.float32)

    @pl.when(k == pl.num_programs(2) - 1)
    def _():
        o_ref[...] = (acc_ref[...] + b_ref[...]).astype(o_ref.dtype)


# ---------------------------------------------------------------------------
# One-time weight packing (do this at init, NOT per forward call)
# ---------------------------------------------------------------------------

def prepare_dense_params(weight_ocHW, bias_o, *, compute_dtype=jnp.bfloat16):
    """Pack Conv2d weights once: (O,C,kH,kW) -> padded (Kp, Op) in compute dtype."""
    O, C, kH, kW = weight_ocHW.shape
    K = C * kH * kW
    tn, tk = _pick_kn_tiles(K, O)
    Kp, Op = _round_up(K, tk), _round_up(O, tn)

    w2d = weight_ocHW.reshape(O, K).T                     # (K, O), canonical RHS
    if (Kp, Op) != (K, O):
        w2d = jnp.pad(w2d, ((0, Kp - K), (0, Op - O)))    # zeros are benign
    w2d = w2d.astype(compute_dtype)

    b2d = bias_o.reshape(1, O).astype(jnp.float32)
    if Op != O:
        b2d = jnp.pad(b2d, ((0, 0), (0, Op - O)))
    return w2d, b2d


# ---------------------------------------------------------------------------
# Forward
# ---------------------------------------------------------------------------

@functools.partial(jax.jit, static_argnames=("out_channels", "compute_dtype"))
def dense_encoder_forward(x_nchw, w_packed, b_packed, *, out_channels,
                          compute_dtype=jnp.bfloat16):
    """out[n,o,0,0] = sum_k x2d[n,k] * w_packed[k,o] + b[o]   (f32 accumulate)."""
    N, C, H, W = x_nchw.shape
    K = C * H * W
    O = out_channels
    Kp, Op = w_packed.shape
    out_dtype = x_nchw.dtype

    tn, tk = _pick_kn_tiles(K, O)
    tm = _pick_m_tile(N, compute_dtype)
    Np = _round_up(N, tm)

    x2d = x_nchw.reshape(N, K).astype(compute_dtype)
    if (Np, Kp) != (N, K):
        x2d = jnp.pad(x2d, ((0, Np - N), (0, Kp - K)))

    grid_m, grid_n, grid_k = Np // tm, Op // tn, Kp // tk

    cd_size = jnp.dtype(compute_dtype).itemsize
    out_size = jnp.dtype(out_dtype).itemsize
    vmem_bytes = (2 * tm * tk * cd_size            # x, double-buffered
                  + 2 * tk * tn * cd_size          # w, double-buffered
                  + 2 * tn * 4                     # bias
                  + 2 * tm * tn * out_size         # out, double-buffered
                  + (tm * tn * 4 if grid_k > 1 else 0))
    vmem_limit = int(min(48 << 20, max(2 * vmem_bytes, 4 << 20)))

    cost = pl.CostEstimate(
        flops=2 * Np * Kp * Op,
        transcendentals=0,
        bytes_accessed=cd_size * (Np * Kp + Kp * Op)
        + 4 * Op + out_size * Np * Op,
    )

    if grid_k == 1:
        # Fast path: whole K in one tile -> no accumulator, no init/finalize.
        out_padded = pl.pallas_call(
            _dense_kernel_single,
            out_shape=jax.ShapeDtypeStruct((Np, Op), out_dtype),
            grid_spec=pltpu.PrefetchScalarGridSpec(
                num_scalar_prefetch=0,
                grid=(grid_m, grid_n),
                in_specs=[
                    pl.BlockSpec((tm, tk), lambda i, j: (i, 0)),   # x
                    pl.BlockSpec((tk, tn), lambda i, j: (0, j)),   # W (K,O)
                    pl.BlockSpec((1, tn), lambda i, j: (0, j)),    # bias
                ],
                out_specs=pl.BlockSpec((tm, tn), lambda i, j: (i, j)),
            ),
            compiler_params=pltpu.CompilerParams(
                dimension_semantics=("parallel", "parallel"),
                vmem_limit_bytes=vmem_limit,
            ),
            cost_estimate=cost,
        )(x2d, w_packed, b_packed)
    else:
        out_padded = pl.pallas_call(
            _dense_kernel_multi,
            out_shape=jax.ShapeDtypeStruct((Np, Op), out_dtype),
            grid_spec=pltpu.PrefetchScalarGridSpec(
                num_scalar_prefetch=0,
                grid=(grid_m, grid_n, grid_k),
                in_specs=[
                    pl.BlockSpec((tm, tk), lambda i, j, k: (i, k)),   # x
                    pl.BlockSpec((tk, tn), lambda i, j, k: (k, j)),   # W (K,O)
                    pl.BlockSpec((1, tn), lambda i, j, k: (0, j)),    # bias
                ],
                out_specs=pl.BlockSpec((tm, tn), lambda i, j, k: (i, j)),
                scratch_shapes=[pltpu.VMEM((tm, tn), jnp.float32)],
            ),
            compiler_params=pltpu.CompilerParams(
                dimension_semantics=("parallel", "parallel", "arbitrary"),
                vmem_limit_bytes=vmem_limit,
            ),
            cost_estimate=cost,
        )(x2d, w_packed, b_packed)

    out2d = out_padded[:N, :O]
    return out2d.reshape(N, O, 1, 1)


def dense_encoder_layer(x_nchw, weight_ocHW, bias_o, *,
                        compute_dtype=jnp.bfloat16):
    """Convenience one-shot wrapper (packs the weight per call; prefer
    prepare_dense_params + dense_encoder_forward for repeated use)."""
    N, C, H, W = x_nchw.shape
    O, Cw, kH, kW = weight_ocHW.shape
    assert C == Cw and H == kH and W == kW, "conv must fully cover the input"
    w_packed, b_packed = prepare_dense_params(
        weight_ocHW, bias_o, compute_dtype=compute_dtype)
    return dense_encoder_forward(x_nchw, w_packed, b_packed,
                                 out_channels=O, compute_dtype=compute_dtype)


def init_params(key, in_channels, out_channels, kernel_size, dtype=jnp.float32):
    """Deterministic Conv2d-like init (uniform(-1/sqrt(fan_in), 1/sqrt(fan_in)))."""
    kw, kb = jax.random.split(key)
    fan_in = in_channels * kernel_size * kernel_size
    bound = 1.0 / jnp.sqrt(jnp.float32(fan_in))
    weight = jax.random.uniform(
        kw, (out_channels, in_channels, kernel_size, kernel_size),
        minval=-bound, maxval=bound, dtype=dtype)
    bias = jax.random.uniform(
        kb, (out_channels,), minval=-bound, maxval=bound, dtype=dtype)
    return weight, bias


if __name__ == "__main__":
    # DenseEncoderLayer(scale=1, spatial_size=16, out_size=32, in_channels=4)
    N, C, H, W = 2, 4, 16, 16
    out_size = 32

    key = jax.random.PRNGKey(0)
    kx, kp = jax.random.split(key)
    x = jax.random.normal(kx, (N, C, H, W), dtype=jnp.float32)
    weight, bias = init_params(kp, in_channels=C, out_channels=out_size,
                               kernel_size=H)

    # One-time weight packing, then the hot forward call.
    w_packed, b_packed = prepare_dense_params(weight, bias)
    out = dense_encoder_forward(x, w_packed, b_packed, out_channels=out_size)
    jax.block_until_ready(out)

    # Reference check (plain JAX "conv as dense", f32). bf16 MXU compute with
    # f32 accumulation -> loosened tolerance vs. the f32 reference.
    ref = (x.reshape(N, -1) @ weight.reshape(out_size, -1).T
           + bias).reshape(N, out_size, 1, 1)
    assert out.shape == (N, out_size, 1, 1)
    assert jnp.allclose(out, ref, atol=2e-2, rtol=2e-2), float(
        jnp.max(jnp.abs(out - ref)))

    print("KERNEL_OK")
</pallas_src>

<mosaic_0001>
module attributes {stable_mosaic.version = 11 : i64} {
  func.func @_dense_kernel_single(%arg0: i32, %arg1: i32, %arg2: memref<16x1024xbf16, #tpu.memory_space<vmem>>, %arg3: memref<1024x128xbf16, #tpu.memory_space<vmem>>, %arg4: memref<1x128xf32, #tpu.memory_space<vmem>>, %arg5: memref<16x128xf32, #tpu.memory_space<vmem>>) attributes {dimension_semantics = [#tpu.dimension_semantics<parallel>, #tpu.dimension_semantics<parallel>], iteration_bounds = array<i64: 1, 1>, scalar_prefetch = 0 : i64, scratch_operands = 0 : i64, tpu.core_type = #tpu.core_type<tc>, window_params = [{transform_indices = @transform_0, window_bounds = array<i64: 16, 1024>}, {transform_indices = @transform_1, window_bounds = array<i64: 1024, 128>}, {transform_indices = @transform_2, window_bounds = array<i64: 1, 128>}, {transform_indices = @transform_3, window_bounds = array<i64: 16, 128>}]} {
    %c0 = arith.constant 0 : index
    %c0_0 = arith.constant 0 : index
    %0 = vector.load %arg2[%c0, %c0_0] : memref<16x1024xbf16, #tpu.memory_space<vmem>>, vector<16x1024xbf16>
    %c0_1 = arith.constant 0 : index
    %c0_2 = arith.constant 0 : index
    %1 = vector.load %arg3[%c0_1, %c0_2] : memref<1024x128xbf16, #tpu.memory_space<vmem>>, vector<1024x128xbf16>
    %cst = arith.constant dense<0.000000e+00> : vector<16x128xf32>
    %2 = tpu.matmul %0, %1, %cst {dimension_numbers = #tpu.dot_dimension_numbers<[1], [0], [0], [1], [0, 0, 1, 1], [], []>} : vector<16x1024xbf16>, vector<1024x128xbf16>, vector<16x128xf32> -> vector<16x128xf32>
    %c0_3 = arith.constant 0 : index
    %c0_4 = arith.constant 0 : index
    %3 = vector.load %arg4[%c0_3, %c0_4] : memref<1x128xf32, #tpu.memory_space<vmem>>, vector<1x128xf32>
    %4 = vector.broadcast %3 : vector<1x128xf32> to vector<16x128xf32>
    %5 = arith.addf %2, %4 : vector<16x128xf32>
    %c0_5 = arith.constant 0 : index
    %c0_6 = arith.constant 0 : index
    %6 = vector.load %arg5[%c0_5, %c0_6] : memref<16x128xf32, #tpu.memory_space<vmem>>, vector<16x128xf32>
    tpu.vector_store %arg5[%c0_5, %c0_6], %5 {strides = array<i32>} : memref<16x128xf32, #tpu.memory_space<vmem>>, vector<16x128xf32>,
    return
  }
  func.func @transform_0(%arg0: i32, %arg1: i32) -> (i32, i32) {
    %c0_i32 = arith.constant 0 : i32
    %c0_i32_0 = arith.constant 0 : i32
    return %arg0, %c0_i32 : i32, i32
  }
  func.func @transform_1(%arg0: i32, %arg1: i32) -> (i32, i32) {
    %c0_i32 = arith.constant 0 : i32
    %c0_i32_0 = arith.constant 0 : i32
    return %c0_i32, %arg1 : i32, i32
  }
  func.func @transform_2(%arg0: i32, %arg1: i32) -> (i32, i32) {
    %c0_i32 = arith.constant 0 : i32
    %c0_i32_0 = arith.constant 0 : i32
    return %c0_i32, %arg1 : i32, i32
  }
  func.func @transform_3(%arg0: i32, %arg1: i32) -> (i32, i32) {
    %c0_i32 = arith.constant 0 : i32
    return %arg0, %arg1 : i32, i32
  }
}

</mosaic_0001>

<llo_original>
// kernel: dense_encoder_forward.1
$region0: #{dense_encoder_forward.1}
  #allocation0 [shape = 'u32[]', space=smem, size = 0x4, offset = 0x4, fixed_abs, tag = 'smem constant byte address 0x4 - core index']
  #allocation1 [shape = 'u32[144,128]{1,0:T(1,128)}', space=vmem, size = 0x12000, scoped, tag = 'internal scratch']
  %s0 = inlined_call_operand.vmem [shape: bf16[16,1024], index: 0, kind: input, shape index: {}]
  %s1 = inlined_call_operand.hbm [shape: bf16[1024,128], index: 1, kind: input, shape index: {}]
  %s2 = inlined_call_operand.vmem [shape: f32[1,128], index: 2, kind: input, shape index: {}]
  %s3 = inlined_call_operand.vmem [shape: f32[16,128], index: 3, kind: output, shape index: {}]
  %s4 = sld [smem:[#allocation0]]
  $region26: #{dense_encoder_forward.1} parent=0
    _
  %s6 = ssub.s32 1, %s4
  %s7 = scalar_select 0, %s6, %s4
  $region1: #{dense_encoder_forward.1} parent=0
    #allocation2 [shape = 'u8[262144]{0}', space=vmem, size = 0x40000, scoped, tag = 'input window, operand 1, single buffered']
    #allocation3 [shape = 's32[1]{0}', space=sflag, size = 0x4, scoped, tag = 'scoped memory for dense_encoder_forward.1']
    %8 = vsyncpa [#allocation3], 0
    // Predicated region
    $region2: #{dense_encoder_forward.1} parent=1 // pred_check
      _
    $region3: #{dense_encoder_forward.1} parent=1 // pred_check_branch
      %10 = sbr.rel (0) target = $region5
    $region4: #{dense_encoder_forward.1} parent=1 // pred_region
      _
    $region5: #{dense_encoder_forward.1} parent=1 // pred_fallthru
      _
    // Predicated region
    $region6: #{dense_encoder_forward.1} parent=1 // pred_check
      _
    $region7: #{dense_encoder_forward.1} parent=1 // pred_check_branch
      %12 = sbr.rel (0) target = $region9
    $region8: #{dense_encoder_forward.1} parent=1 // pred_region
      %s14 = ssub.s32 8192, 8192
      %15 = vsyncadd [#allocation3], %s14
      %s16 = sshll.u32 [#allocation2], 4
      %s17 = int_to_ptr.vmem [resolvable:$true] %s16
      %22 = dma.hbm_to_vmem [thread:$0]  %s1, 8192, %s17, [#allocation3], 64, 64, 4
    $region9: #{dense_encoder_forward.1} parent=1 // pred_fallthru
      _
    // Predicated region
    $region10: #{dense_encoder_forward.1} parent=1 // pred_check
      _
    $region11: #{dense_encoder_forward.1} parent=1 // pred_check_branch
      %24 = sbr.rel (0) target = $region13
    $region12: #{dense_encoder_forward.1} parent=1 // pred_region
      _
    $region13: #{dense_encoder_forward.1} parent=1 // pred_fallthru
      _
    // Predicated region
    $region14: #{dense_encoder_forward.1} parent=1 // pred_check
      _
    $region15: #{dense_encoder_forward.1} parent=1 // pred_check_branch
      %26 = sbr.rel (0) target = $region17
    $region16: #{dense_encoder_forward.1} parent=1 // pred_region
      %27 = dma.done [#allocation3], 8192
    $region17: #{dense_encoder_forward.1} parent=1 // pred_fallthru
      _
    %v29 = vld [vmem:[%s0] sm:$0xff]
    %v30 = vld [vmem:[%s0 + $0x8] sm:$0xff]
    %v31 = vld [vmem:[%s0 + $0x10] sm:$0xff]
    %v32 = vld [vmem:[%s0 + $0x18] sm:$0xff]
    %v33 = vld [vmem:[%s0 + $0x20] sm:$0xff]
    %v34 = vld [vmem:[%s0 + $0x28] sm:$0xff]
    %v35 = vld [vmem:[%s0 + $0x30] sm:$0xff]
    %v36 = vld [vmem:[%s0 + $0x38] sm:$0xff]
    %v37 = vld [vmem:[#allocation2] sm:$0xf]
    %v38 = vld [vmem:[#allocation2 + $0x4] sm:$0xf]
    %v39 = vld [vmem:[#allocation2 + $0x8] sm:$0xf]
    %v40 = vld [vmem:[#allocation2 + $0xc] sm:$0xf]
    %v41 = vld [vmem:[#allocation2 + $0x10] sm:$0xf]
    %v42 = vld [vmem:[#allocation2 + $0x14] sm:$0xf]
    %v43 = vld [vmem:[#allocation2 + $0x18] sm:$0xf]
    %v44 = vld [vmem:[#allocation2 + $0x1c] sm:$0xf]
    %v45 = vld [vmem:[#allocation2 + $0x20] sm:$0xf]
    %v46 = vld [vmem:[#allocation2 + $0x24] sm:$0xf]
    %v47 = vld [vmem:[#allocation2 + $0x28] sm:$0xf]
    %v48 = vld [vmem:[#allocation2 + $0x2c] sm:$0xf]
    %v49 = vld [vmem:[#allocation2 + $0x30] sm:$0xf]
    %v50 = vld [vmem:[#allocation2 + $0x34] sm:$0xf]
    %v51 = vld [vmem:[#allocation2 + $0x38] sm:$0xf]
    %v52 = vld [vmem:[#allocation2 + $0x3c] sm:$0xf]
    %v53 = vld [vmem:[#allocation2 + $0x40] sm:$0xf]
    %v54 = vld [vmem:[#allocation2 + $0x44] sm:$0xf]
    %v55 = vld [vmem:[#allocation2 + $0x48] sm:$0xf]
    %v56 = vld [vmem:[#allocation2 + $0x4c] sm:$0xf]
    %v57 = vld [vmem:[#allocation2 + $0x50] sm:$0xf]
    %v58 = vld [vmem:[#allocation2 + $0x54] sm:$0xf]
    %v59 = vld [vmem:[#allocation2 + $0x58] sm:$0xf]
    %v60 = vld [vmem:[#allocation2 + $0x5c] sm:$0xf]
    %v61 = vld [vmem:[#allocation2 + $0x60] sm:$0xf]
    %v62 = vld [vmem:[#allocation2 + $0x64] sm:$0xf]
    %v63 = vld [vmem:[#allocation2 + $0x68] sm:$0xf]
    %v64 = vld [vmem:[#allocation2 + $0x6c] sm:$0xf]
    %v65 = vld [vmem:[#allocation2 + $0x70] sm:$0xf]
    %v66 = vld [vmem:[#allocation2 + $0x74] sm:$0xf]
    %v67 = vld [vmem:[#allocation2 + $0x78] sm:$0xf]
    %v68 = vld [vmem:[#allocation2 + $0x7c] sm:$0xf]
    %v69 = vld [vmem:[#allocation2 + $0x80] sm:$0xf]
    %v70 = vld [vmem:[#allocation2 + $0x84] sm:$0xf]
    %v71 = vld [vmem:[#allocation2 + $0x88] sm:$0xf]
    %v72 = vld [vmem:[#allocation2 + $0x8c] sm:$0xf]
    %v73 = vld [vmem:[#allocation2 + $0x90] sm:$0xf]
    %v74 = vld [vmem:[#allocation2 + $0x94] sm:$0xf]
    %v75 = vld [vmem:[#allocation2 + $0x98] sm:$0xf]
    %v76 = vld [vmem:[#allocation2 + $0x9c] sm:$0xf]
    %v77 = vld [vmem:[#allocation2 + $0xa0] sm:$0xf]
    %v78 = vld [vmem:[#allocation2 + $0xa4] sm:$0xf]
    %v79 = vld [vmem:[#allocation2 + $0xa8] sm:$0xf]
    %v80 = vld [vmem:[#allocation2 + $0xac] sm:$0xf]
    %v81 = vld [vmem:[#allocation2 + $0xb0] sm:$0xf]
    %v82 = vld [vmem:[#allocation2 + $0xb4] sm:$0xf]
    %v83 = vld [vmem:[#allocation2 + $0xb8] sm:$0xf]
    %v84 = vld [vmem:[#allocation2 + $0xbc] sm:$0xf]
    %v85 = vld [vmem:[#allocation2 + $0xc0] sm:$0xf]
    %v86 = vld [vmem:[#allocation2 + $0xc4] sm:$0xf]
    %v87 = vld [vmem:[#allocation2 + $0xc8] sm:$0xf]
    %v88 = vld [vmem:[#allocation2 + $0xcc] sm:$0xf]
    %v89 = vld [vmem:[#allocation2 + $0xd0] sm:$0xf]
    %v90 = vld [vmem:[#allocation2 + $0xd4] sm:$0xf]
    %v91 = vld [vmem:[#allocation2 + $0xd8] sm:$0xf]
    %v92 = vld [vmem:[#allocation2 + $0xdc] sm:$0xf]
    %v93 = vld [vmem:[#allocation2 + $0xe0] sm:$0xf]
    %v94 = vld [vmem:[#allocation2 + $0xe4] sm:$0xf]
    %v95 = vld [vmem:[#allocation2 + $0xe8] sm:$0xf]
    %v96 = vld [vmem:[#allocation2 + $0xec] sm:$0xf]
    %v97 = vld [vmem:[#allocation2 + $0xf0] sm:$0xf]
    %v98 = vld [vmem:[#allocation2 + $0xf4] sm:$0xf]
    %v99 = vld [vmem:[#allocation2 + $0xf8] sm:$0xf]
    %v100 = vld [vmem:[#allocation2 + $0xfc] sm:$0xf]
    %v101 = vld [vmem:[#allocation2 + $0x100] sm:$0xf]
    %v102 = vld [vmem:[#allocation2 + $0x104] sm:$0xf]
    %v103 = vld [vmem:[#allocation2 + $0x108] sm:$0xf]
    %v104 = vld [vmem:[#allocation2 + $0x10c] sm:$0xf]
    %v105 = vld [vmem:[#allocation2 + $0x110] sm:$0xf]
    %v106 = vld [vmem:[#allocation2 + $0x114] sm:$0xf]
    %v107 = vld [vmem:[#allocation2 + $0x118] sm:$0xf]
    %v108 = vld [vmem:[#allocation2 + $0x11c] sm:$0xf]
    %v109 = vld [vmem:[#allocation2 + $0x120] sm:$0xf]
    %v110 = vld [vmem:[#allocation2 + $0x124] sm:$0xf]
    %v111 = vld [vmem:[#allocation2 + $0x128] sm:$0xf]
    %v112 = vld [vmem:[#allocation2 + $0x12c] sm:$0xf]
    %v113 = vld [vmem:[#allocation2 + $0x130] sm:$0xf]
    %v114 = vld [vmem:[#allocation2 + $0x134] sm:$0xf]
    %v115 = vld [vmem:[#allocation2 + $0x138] sm:$0xf]
    %v116 = vld [vmem:[#allocation2 + $0x13c] sm:$0xf]
    %v117 = vld [vmem:[#allocation2 + $0x140] sm:$0xf]
    %v118 = vld [vmem:[#allocation2 + $0x144] sm:$0xf]
    %v119 = vld [vmem:[#allocation2 + $0x148] sm:$0xf]
    %v120 = vld [vmem:[#allocation2 + $0x14c] sm:$0xf]
    %v121 = vld [vmem:[#allocation2 + $0x150] sm:$0xf]
    %v122 = vld [vmem:[#allocation2 + $0x154] sm:$0xf]
    %v123 = vld [vmem:[#allocation2 + $0x158] sm:$0xf]
    %v124 = vld [vmem:[#allocation2 + $0x15c] sm:$0xf]
    %v125 = vld [vmem:[#allocation2 + $0x160] sm:$0xf]
    %v126 = vld [vmem:[#allocation2 + $0x164] sm:$0xf]
    %v127 = vld [vmem:[#allocation2 + $0x168] sm:$0xf]
    %v128 = vld [vmem:[#allocation2 + $0x16c] sm:$0xf]
    %v129 = vld [vmem:[#allocation2 + $0x170] sm:$0xf]
    %v130 = vld [vmem:[#allocation2 + $0x174] sm:$0xf]
    %v131 = vld [vmem:[#allocation2 + $0x178] sm:$0xf]
    %v132 = vld [vmem:[#allocation2 + $0x17c] sm:$0xf]
    %v133 = vld [vmem:[#allocation2 + $0x180] sm:$0xf]
    %v134 = vld [vmem:[#allocation2 + $0x184] sm:$0xf]
    %v135 = vld [vmem:[#allocation2 + $0x188] sm:$0xf]
    %v136 = vld [vmem:[#allocation2 + $0x18c] sm:$0xf]
    %v137 = vld [vmem:[#allocation2 + $0x190] sm:$0xf]
    %v138 = vld [vmem:[#allocation2 + $0x194] sm:$0xf]
    %v139 = vld [vmem:[#allocation2 + $0x198] sm:$0xf]
    %v140 = vld [vmem:[#allocation2 + $0x19c] sm:$0xf]
    %v141 = vld [vmem:[#allocation2 + $0x1a0] sm:$0xf]
    %v142 = vld [vmem:[#allocation2 + $0x1a4] sm:$0xf]
    %v143 = vld [vmem:[#allocation2 + $0x1a8] sm:$0xf]
    %v144 = vld [vmem:[#allocation2 + $0x1ac] sm:$0xf]
    %v145 = vld [vmem:[#allocation2 + $0x1b0] sm:$0xf]
    %v146 = vld [vmem:[#allocation2 + $0x1b4] sm:$0xf]
    %v147 = vld [vmem:[#allocation2 + $0x1b8] sm:$0xf]
    %v148 = vld [vmem:[#allocation2 + $0x1bc] sm:$0xf]
    %v149 = vld [vmem:[#allocation2 + $0x1c0] sm:$0xf]
    %v150 = vld [vmem:[#allocation2 + $0x1c4] sm:$0xf]
    %v151 = vld [vmem:[#allocation2 + $0x1c8] sm:$0xf]
    %v152 = vld [vmem:[#allocation2 + $0x1cc] sm:$0xf]
    %v153 = vld [vmem:[#allocation2 + $0x1d0] sm:$0xf]
    %v154 = vld [vmem:[#allocation2 + $0x1d4] sm:$0xf]
    %v155 = vld [vmem:[#allocation2 + $0x1d8] sm:$0xf]
    %v156 = vld [vmem:[#allocation2 + $0x1dc] sm:$0xf]
    %v157 = vld [vmem:[#allocation2 + $0x1e0] sm:$0xf]
    %v158 = vld [vmem:[#allocation2 + $0x1e4] sm:$0xf]
    %v159 = vld [vmem:[#allocation2 + $0x1e8] sm:$0xf]
    %v160 = vld [vmem:[#allocation2 + $0x1ec] sm:$0xf]
    %v161 = vld [vmem:[#allocation2 + $0x1f0] sm:$0xf]
    %v162 = vld [vmem:[#allocation2 + $0x1f4] sm:$0xf]
    %v163 = vld [vmem:[#allocation2 + $0x1f8] sm:$0xf]
    %v164 = vld [vmem:[#allocation2 + $0x1fc] sm:$0xf]
    %v165 = vld [vmem:[%s2] sm:$0x1]
    %v167 = vlaneseq
    %v168 = vshrl.u32 %v167, 7
    %v169 = vsub.s32 0, %v168
    %v170 = vrot.slane %v165, %v169
    %v180 = vunpack.c.l.b16 %v29
    %v181 = vunpack.c.h.b16 %v29
    %v182 = vunpack.c.l.b16 %v30
    %v183 = vunpack.c.h.b16 %v30
    %v184 = vunpack.c.l.b16 %v31
    %v185 = vunpack.c.h.b16 %v31
    %v186 = vunpack.c.l.b16 %v32
    %v187 = vunpack.c.h.b16 %v32
    %v188 = vunpack.c.l.b16 %v33
    %v189 = vunpack.c.h.b16 %v33
    %v190 = vunpack.c.l.b16 %v34
    %v191 = vunpack.c.h.b16 %v34
    %v192 = vunpack.c.l.b16 %v35
    %v193 = vunpack.c.h.b16 %v35
    %v194 = vunpack.c.l.b16 %v36
    %v195 = vunpack.c.h.b16 %v36
    %v196 = vpack.c.b16 %v188, %v180
    %v197 = vpack.c.b16 %v189, %v181
    %v198 = vpack.c.b16 %v190, %v182
    %v199 = vpack.c.b16 %v191, %v183
    %v200 = vpack.c.b16 %v192, %v184
    %v201 = vpack.c.b16 %v193, %v185
    %v202 = vpack.c.b16 %v194, %v186
    %v203 = vpack.c.b16 %v195, %v187
    %v340 = vunpack.c.l.b16 %v37
    %v341 = vunpack.c.l.b16 %v38
    %v342 = vunpack.c.l.b16 %v39
    %v343 = vunpack.c.l.b16 %v40
    %v344 = vunpack.c.l.b16 %v41
    %v345 = vunpack.c.l.b16 %v42
    %v346 = vunpack.c.l.b16 %v43
    %v347 = vunpack.c.l.b16 %v44
    %v348 = vunpack.c.l.b16 %v45
    %v349 = vunpack.c.l.b16 %v46
    %v350 = vunpack.c.l.b16 %v47
    %v351 = vunpack.c.l.b16 %v48
    %v352 = vunpack.c.l.b16 %v49
    %v353 = vunpack.c.l.b16 %v50
    %v354 = vunpack.c.l.b16 %v51
    %v355 = vunpack.c.l.b16 %v52
    %v356 = vunpack.c.l.b16 %v53
    %v357 = vunpack.c.l.b16 %v54
    %v358 = vunpack.c.l.b16 %v55
    %v359 = vunpack.c.l.b16 %v56
    %v360 = vunpack.c.l.b16 %v57
    %v361 = vunpack.c.l.b16 %v58
    %v362 = vunpack.c.l.b16 %v59
    %v363 = vunpack.c.l.b16 %v60
    %v364 = vunpack.c.l.b16 %v61
    %v365 = vunpack.c.l.b16 %v62
    %v366 = vunpack.c.l.b16 %v63
    %v367 = vunpack.c.l.b16 %v64
    %v368 = vunpack.c.l.b16 %v65
    %v369 = vunpack.c.l.b16 %v66
    %v370 = vunpack.c.l.b16 %v67
    %v371 = vunpack.c.l.b16 %v68
    %v372 = vunpack.c.l.b16 %v69
    %v373 = vunpack.c.l.b16 %v70
    %v374 = vunpack.c.l.b16 %v71
    %v375 = vunpack.c.l.b16 %v72
    %v376 = vunpack.c.l.b16 %v73
    %v377 = vunpack.c.l.b16 %v74
    %v378 = vunpack.c.l.b16 %v75
    %v379 = vunpack.c.l.b16 %v76
    %v380 = vunpack.c.l.b16 %v77
    %v381 = vunpack.c.l.b16 %v78
    %v382 = vunpack.c.l.b16 %v79
    %v383 = vunpack.c.l.b16 %v80
    %v384 = vunpack.c.l.b16 %v81
    %v385 = vunpack.c.l.b16 %v82
    %v386 = vunpack.c.l.b16 %v83
    %v387 = vunpack.c.l.b16 %v84
    %v388 = vunpack.c.l.b16 %v85
    %v389 = vunpack.c.l.b16 %v86
    %v390 = vunpack.c.l.b16 %v87
    %v391 = vunpack.c.l.b16 %v88
    %v392 = vunpack.c.l.b16 %v89
    %v393 = vunpack.c.l.b16 %v90
    %v394 = vunpack.c.l.b16 %v91
    %v395 = vunpack.c.l.b16 %v92
    %v396 = vunpack.c.l.b16 %v93
    %v397 = vunpack.c.l.b16 %v94
    %v398 = vunpack.c.l.b16 %v95
    %v399 = vunpack.c.l.b16 %v96
    %v400 = vunpack.c.l.b16 %v97
    %v401 = vunpack.c.l.b16 %v98
    %v402 = vunpack.c.l.b16 %v99
    %v403 = vunpack.c.l.b16 %v100
    %v404 = vunpack.c.l.b16 %v101
    %v405 = vunpack.c.l.b16 %v102
    %v406 = vunpack.c.l.b16 %v103
    %v407 = vunpack.c.l.b16 %v104
    %v408 = vunpack.c.l.b16 %v105
    %v409 = vunpack.c.l.b16 %v106
    %v410 = vunpack.c.l.b16 %v107
    %v411 = vunpack.c.l.b16 %v108
    %v412 = vunpack.c.l.b16 %v109
    %v413 = vunpack.c.l.b16 %v110
    %v414 = vunpack.c.l.b16 %v111
    %v415 = vunpack.c.l.b16 %v112
    %v416 = vunpack.c.l.b16 %v113
    %v417 = vunpack.c.l.b16 %v114
    %v418 = vunpack.c.l.b16 %v115
    %v419 = vunpack.c.l.b16 %v116
    %v420 = vunpack.c.l.b16 %v117
    %v421 = vunpack.c.l.b16 %v118
    %v422 = vunpack.c.l.b16 %v119
    %v423 = vunpack.c.l.b16 %v120
    %v424 = vunpack.c.l.b16 %v121
    %v425 = vunpack.c.l.b16 %v122
    %v426 = vunpack.c.l.b16 %v123
    %v427 = vunpack.c.l.b16 %v124
    %v428 = vunpack.c.l.b16 %v125
    %v429 = vunpack.c.l.b16 %v126
    %v430 = vunpack.c.l.b16 %v127
    %v431 = vunpack.c.l.b16 %v128
    %v432 = vunpack.c.l.b16 %v129
    %v433 = vunpack.c.l.b16 %v130
    %v434 = vunpack.c.l.b16 %v131
    %v435 = vunpack.c.l.b16 %v132
    %v436 = vunpack.c.l.b16 %v133
    %v437 = vunpack.c.l.b16 %v134
    %v438 = vunpack.c.l.b16 %v135
    %v439 = vunpack.c.l.b16 %v136
    %v440 = vunpack.c.l.b16 %v137
    %v441 = vunpack.c.l.b16 %v138
    %v442 = vunpack.c.l.b16 %v139
    %v443 = vunpack.c.l.b16 %v140
    %v444 = vunpack.c.l.b16 %v141
    %v445 = vunpack.c.l.b16 %v142
    %v446 = vunpack.c.l.b16 %v143
    %v447 = vunpack.c.l.b16 %v144
    %v448 = vunpack.c.l.b16 %v145
    %v449 = vunpack.c.l.b16 %v146
    %v450 = vunpack.c.l.b16 %v147
    %v451 = vunpack.c.l.b16 %v148
    %v452 = vunpack.c.l.b16 %v149
    %v453 = vunpack.c.l.b16 %v150
    %v454 = vunpack.c.l.b16 %v151
    %v455 = vunpack.c.l.b16 %v152
    %v456 = vunpack.c.l.b16 %v153
    %v457 = vunpack.c.l.b16 %v154
    %v458 = vunpack.c.l.b16 %v155
    %v459 = vunpack.c.l.b16 %v156
    %v460 = vunpack.c.l.b16 %v157
    %v461 = vunpack.c.l.b16 %v158
    %v462 = vunpack.c.l.b16 %v159
    %v463 = vunpack.c.l.b16 %v160
    %v464 = vunpack.c.l.b16 %v161
    %v465 = vunpack.c.l.b16 %v162
    %v466 = vunpack.c.l.b16 %v163
    %v467 = vunpack.c.l.b16 %v164
    %v468 = vpack.c.b16 %v341, %v340
    %v469 = vpack.c.b16 %v343, %v342
    %v470 = vpack.c.b16 %v345, %v344
    %v471 = vpack.c.b16 %v347, %v346
    %v472 = vpack.c.b16 %v349, %v348
    %v473 = vpack.c.b16 %v351, %v350
    %v474 = vpack.c.b16 %v353, %v352
    %v475 = vpack.c.b16 %v355, %v354
    %v476 = vpack.c.b16 %v357, %v356
    %v477 = vpack.c.b16 %v359, %v358
    %v478 = vpack.c.b16 %v361, %v360
    %v479 = vpack.c.b16 %v363, %v362
    %v480 = vpack.c.b16 %v365, %v364
    %v481 = vpack.c.b16 %v367, %v366
    %v482 = vpack.c.b16 %v369, %v368
    %v483 = vpack.c.b16 %v371, %v370
    %v484 = vpack.c.b16 %v373, %v372
    %v485 = vpack.c.b16 %v375, %v374
    %v486 = vpack.c.b16 %v377, %v376
    %v487 = vpack.c.b16 %v379, %v378
    %v488 = vpack.c.b16 %v381, %v380
    %v489 = vpack.c.b16 %v383, %v382
    %v490 = vpack.c.b16 %v385, %v384
    %v491 = vpack.c.b16 %v387, %v386
    %v492 = vpack.c.b16 %v389, %v388
    %v493 = vpack.c.b16 %v391, %v390
    %v494 = vpack.c.b16 %v393, %v392
    %v495 = vpack.c.b16 %v395, %v394
    %v496 = vpack.c.b16 %v397, %v396
    %v497 = vpack.c.b16 %v399, %v398
    %v498 = vpack.c.b16 %v401, %v400
    %v499 = vpack.c.b16 %v403, %v402
    %v500 = vpack.c.b16 %v405, %v404
    %v501 = vpack.c.b16 %v407, %v406
    %v502 = vpack.c.b16 %v409, %v408
    %v503 = vpack.c.b16 %v411, %v410
    %v504 = vpack.c.b16 %v413, %v412
    %v505 = vpack.c.b16 %v415, %v414
    %v506 = vpack.c.b16 %v417, %v416
    %v507 = vpack.c.b16 %v419, %v418
    %v508 = vpack.c.b16 %v421, %v420
    %v509 = vpack.c.b16 %v423, %v422
    %v510 = vpack.c.b16 %v425, %v424
    %v511 = vpack.c.b16 %v427, %v426
    %v512 = vpack.c.b16 %v429, %v428
    %v513 = vpack.c.b16 %v431, %v430
    %v514 = vpack.c.b16 %v433, %v432
    %v515 = vpack.c.b16 %v435, %v434
    %v516 = vpack.c.b16 %v437, %v436
    %v517 = vpack.c.b16 %v439, %v438
    %v518 = vpack.c.b16 %v441, %v440
    %v519 = vpack.c.b16 %v443, %v442
    %v520 = vpack.c.b16 %v445, %v444
    %v521 = vpack.c.b16 %v447, %v446
    %v522 = vpack.c.b16 %v449, %v448
    %v523 = vpack.c.b16 %v451, %v450
    %v524 = vpack.c.b16 %v453, %v452
    %v525 = vpack.c.b16 %v455, %v454
    %v526 = vpack.c.b16 %v457, %v456
    %v527 = vpack.c.b16 %v459, %v458
    %v528 = vpack.c.b16 %v461, %v460
    %v529 = vpack.c.b16 %v463, %v462
    %v530 = vpack.c.b16 %v465, %v464
    %v531 = vpack.c.b16 %v467, %v466
    %596 = vmatprep.subr.bf16.mxu0 0
    %597 = vmatpush1.bf16.msra.mxu0 %v475
    %598 = vmatprep.subr.bf16.mxu0 0
    %599 = vmatpush1.bf16.msra.mxu0 %v474
    %600 = vmatprep.subr.bf16.mxu0 0
    %601 = vmatpush1.bf16.msra.mxu0 %v473
    %602 = vmatprep.subr.bf16.mxu0 0
    %603 = vmatpush1.bf16.msra.mxu0 %v472
    %604 = vmatprep.subr.bf16.mxu0 0
    %605 = vmatpush1.bf16.msra.mxu0 %v471
    %606 = vmatprep.subr.bf16.mxu0 0
    %607 = vmatpush1.bf16.msra.mxu0 %v470
    %608 = vmatprep.subr.bf16.mxu0 0
    %609 = vmatpush1.bf16.msra.mxu0 %v469
    %610 = vmatprep.subr.bf16.mxu0 0
    %611 = vmatpush1.bf16.msra.mxu0 %v468
    %612 = vmatprep.subr.bf16.mxu0 0
    %613 = vmatpush2.bf16.msra.mxu0 %v483
    %614 = vmatprep.subr.bf16.mxu0 0
    %615 = vmatpush2.bf16.msra.mxu0 %v482
    %616 = vmatprep.subr.bf16.mxu0 0
    %617 = vmatpush2.bf16.msra.mxu0 %v481
    %618 = vmatprep.subr.bf16.mxu0 0
    %619 = vmatpush2.bf16.msra.mxu0 %v480
    %620 = vmatprep.subr.bf16.mxu0 0
    %621 = vmatpush2.bf16.msra.mxu0 %v479
    %622 = vmatprep.subr.bf16.mxu0 0
    %623 = vmatpush2.bf16.msra.mxu0 %v478
    %624 = vmatprep.subr.bf16.mxu0 0
    %625 = vmatpush2.bf16.msra.mxu0 %v477
    %626 = vmatprep.subr.bf16.mxu0 0
    %627 = vmatpush2.bf16.msra.mxu0 %v476
    %628 = vmatprep.mubr.bf16.mxu0 %v197
    %629 = vmatmul.mubr.bf16.gmra.mxu0 %v196
    %v630 = vpop.f32.mrf.mxu0
    %v631 = vadd.f32 %v170, %v630
    %v632 = vpop.f32.mrf.mxu0
    %v633 = vpop.f32.mrf.mxu0
    %v634 = vadd.f32 %v170, %v633
    %v635 = vpop.f32.mrf.mxu0
    %636 = vdwg.mxu0
    %637 = vmatprep.subr.bf16.mxu0 0
    %638 = vmatpush1.bf16.msra.mxu0 %v491
    %639 = vmatprep.subr.bf16.mxu0 0
    %640 = vmatpush1.bf16.msra.mxu0 %v490
    %641 = vmatprep.subr.bf16.mxu0 0
    %642 = vmatpush1.bf16.msra.mxu0 %v489
    %643 = vmatprep.subr.bf16.mxu0 0
    %644 = vmatpush1.bf16.msra.mxu0 %v488
    %645 = vmatprep.subr.bf16.mxu0 0
    %646 = vmatpush1.bf16.msra.mxu0 %v487
    %647 = vmatprep.subr.bf16.mxu0 0
    %648 = vmatpush1.bf16.msra.mxu0 %v486
    %649 = vmatprep.subr.bf16.mxu0 0
    %650 = vmatpush1.bf16.msra.mxu0 %v485
    %651 = vmatprep.subr.bf16.mxu0 0
    %652 = vmatpush1.bf16.msra.mxu0 %v484
    %653 = vmatprep.subr.bf16.mxu0 0
    %654 = vmatpush2.bf16.msra.mxu0 %v499
    %655 = vmatprep.subr.bf16.mxu0 0
    %656 = vmatpush2.bf16.msra.mxu0 %v498
    %657 = vmatprep.subr.bf16.mxu0 0
    %658 = vmatpush2.bf16.msra.mxu0 %v497
    %659 = vmatprep.subr.bf16.mxu0 0
    %660 = vmatpush2.bf16.msra.mxu0 %v496
    %661 = vmatprep.subr.bf16.mxu0 0
    %662 = vmatpush2.bf16.msra.mxu0 %v495
    %663 = vmatprep.subr.bf16.mxu0 0
    %664 = vmatpush2.bf16.msra.mxu0 %v494
    %665 = vmatprep.subr.bf16.mxu0 0
    %666 = vmatpush2.bf16.msra.mxu0 %v493
    %667 = vmatprep.subr.bf16.mxu0 0
    %668 = vmatpush2.bf16.msra.mxu0 %v492
    %669 = vmatprep.mubr.bf16.mxu0 %v199
    %670 = vmatmul.mubr.bf16.gmra.mxu0 %v198
    %v671 = vpop.f32.mrf.mxu0
    %v672 = vadd.f32 %v631, %v671
    %v673 = vpop.f32.mrf.mxu0
    %v674 = vpop.f32.mrf.mxu0
    %v675 = vadd.f32 %v634, %v674
    %v676 = vpop.f32.mrf.mxu0
    %677 = vdwg.mxu0
    %678 = vmatprep.subr.bf16.mxu0 0
    %679 = vmatpush1.bf16.msra.mxu0 %v507
    %680 = vmatprep.subr.bf16.mxu0 0
    %681 = vmatpush1.bf16.msra.mxu0 %v506
    %682 = vmatprep.subr.bf16.mxu0 0
    %683 = vmatpush1.bf16.msra.mxu0 %v505
    %684 = vmatprep.subr.bf16.mxu0 0
    %685 = vmatpush1.bf16.msra.mxu0 %v504
    %686 = vmatprep.subr.bf16.mxu0 0
    %687 = vmatpush1.bf16.msra.mxu0 %v503
    %688 = vmatprep.subr.bf16.mxu0 0
    %689 = vmatpush1.bf16.msra.mxu0 %v502
    %690 = vmatprep.subr.bf16.mxu0 0
    %691 = vmatpush1.bf16.msra.mxu0 %v501
    %692 = vmatprep.subr.bf16.mxu0 0
    %693 = vmatpush1.bf16.msra.mxu0 %v500
    %694 = vmatprep.subr.bf16.mxu0 0
    %695 = vmatpush2.bf16.msra.mxu0 %v515
    %696 = vmatprep.subr.bf16.mxu0 0
    %697 = vmatpush2.bf16.msra.mxu0 %v514
    %698 = vmatprep.subr.bf16.mxu0 0
    %699 = vmatpush2.bf16.msra.mxu0 %v513
    %700 = vmatprep.subr.bf16.mxu0 0
    %701 = vmatpush2.bf16.msra.mxu0 %v512
    %702 = vmatprep.subr.bf16.mxu0 0
    %703 = vmatpush2.bf16.msra.mxu0 %v511
    %704 = vmatprep.subr.bf16.mxu0 0
    %705 = vmatpush2.bf16.msra.mxu0 %v510
    %706 = vmatprep.subr.bf16.mxu0 0
    %707 = vmatpush2.bf16.msra.mxu0 %v509
    %708 = vmatprep.subr.bf16.mxu0 0
    %709 = vmatpush2.bf16.msra.mxu0 %v508
    %710 = vmatprep.mubr.bf16.mxu0 %v201
    %711 = vmatmul.mubr.bf16.gmra.mxu0 %v200
    %v712 = vpop.f32.mrf.mxu0
    %v713 = vadd.f32 %v672, %v712
    %v714 = vpop.f32.mrf.mxu0
    %v715 = vpop.f32.mrf.mxu0
    %v716 = vadd.f32 %v675, %v715
    %v717 = vpop.f32.mrf.mxu0
    %718 = vdwg.mxu0
    %719 = vmatprep.subr.bf16.mxu0 0
    %720 = vmatpush1.bf16.msra.mxu0 %v523
    %721 = vmatprep.subr.bf16.mxu0 0
    %722 = vmatpush1.bf16.msra.mxu0 %v522
    %723 = vmatprep.subr.bf16.mxu0 0
    %724 = vmatpush1.bf16.msra.mxu0 %v521
    %725 = vmatprep.subr.bf16.mxu0 0
    %726 = vmatpush1.bf16.msra.mxu0 %v520
    %727 = vmatprep.subr.bf16.mxu0 0
    %728 = vmatpush1.bf16.msra.mxu0 %v519
    %729 = vmatprep.subr.bf16.mxu0 0
    %730 = vmatpush1.bf16.msra.mxu0 %v518
    %731 = vmatprep.subr.bf16.mxu0 0
    %732 = vmatpush1.bf16.msra.mxu0 %v517
    %733 = vmatprep.subr.bf16.mxu0 0
    %734 = vmatpush1.bf16.msra.mxu0 %v516
    %735 = vmatprep.subr.bf16.mxu0 0
    %736 = vmatpush2.bf16.msra.mxu0 %v531
    %737 = vmatprep.subr.bf16.mxu0 0
    %738 = vmatpush2.bf16.msra.mxu0 %v530
    %739 = vmatprep.subr.bf16.mxu0 0
    %740 = vmatpush2.bf16.msra.mxu0 %v529
    %741 = vmatprep.subr.bf16.mxu0 0
    %742 = vmatpush2.bf16.msra.mxu0 %v528
    %743 = vmatprep.subr.bf16.mxu0 0
    %744 = vmatpush2.bf16.msra.mxu0 %v527
    %745 = vmatprep.subr.bf16.mxu0 0
    %746 = vmatpush2.bf16.msra.mxu0 %v526
    %747 = vmatprep.subr.bf16.mxu0 0
    %748 = vmatpush2.bf16.msra.mxu0 %v525
    %749 = vmatprep.subr.bf16.mxu0 0
    %750 = vmatpush2.bf16.msra.mxu0 %v524
    %751 = vmatprep.mubr.bf16.mxu0 %v203
    %752 = vmatmul.mubr.bf16.gmra.mxu0 %v202
    %v753 = vpop.f32.mrf.mxu0
    %v754 = vadd.f32 %v713, %v753
    %v755 = vpop.f32.mrf.mxu0
    %v756 = vpop.f32.mrf.mxu0
    %v757 = vadd.f32 %v716, %v756
    %v758 = vpop.f32.mrf.mxu0
    %759 = vdwg.mxu0
    %760 = vst [vmem:[%s3] sm:$0xff] %v754
    %761 = vst [vmem:[%s3 + $0x8] sm:$0xff] %v757
    // Predicated region
    $region18: #{dense_encoder_forward.1} parent=1 // pred_check
      _
    $region19: #{dense_encoder_forward.1} parent=1 // pred_check_branch
      %763 = sbr.rel (0) target = $region21
    $region20: #{dense_encoder_forward.1} parent=1 // pred_region
      _
    $region21: #{dense_encoder_forward.1} parent=1 // pred_fallthru
      _
    // Predicated region
    $region22: #{dense_encoder_forward.1} parent=1 // pred_check
      _
    $region23: #{dense_encoder_forward.1} parent=1 // pred_check_branch
      %765 = sbr.rel (0) target = $region25
    $region24: #{dense_encoder_forward.1} parent=1 // pred_region
      _
    $region25: #{dense_encoder_forward.1} parent=1 // pred_fallthru
      _
    %766 = vsyncpa [#allocation3], 1

</llo_original>
